<compile_context>
chip_gen: v7x
topology: tpu7x:2x2x1
jax: 0.10.0
libtpu: 0.0.40
codegen_flags: <defaults>
</compile_context>

<pallas_src>
import math

import jax
import jax.numpy as jnp
from jax.experimental import pallas as pl
from jax.experimental.pallas import tpu as pltpu


def _copy_kernel(x_ref, o_ref):
    # Pure tile copy: o[i, j] block <- x[i, j] block.
    o_ref[...] = x_ref[...]


# Per-tile byte budget.  Each input and output is double-buffered by the
# Pallas pipeline -> ~4x tile bytes of VMEM.  3 MiB/tile -> ~12 MiB total,
# which fits v5e's ~16 MiB default scoped VMEM and v6e/v7x's 32 MiB defaults
# with headroom (no vmem_limit_bytes override needed).  Tiles this size are
# already large enough to sit at the HBM-bandwidth roofline.
_PER_TILE_BYTES = 3 * 1024 * 1024


def _largest_aligned_divisor(n: int, align: int, cap: int):
    """Largest d with n % d == 0, d % align == 0, d <= cap (None if none)."""
    best = None
    cap = min(n, cap)
    d = align
    while d <= cap:
        if n % d == 0:
            best = d
        d += align
    return best


def expand_temporal_dim(x_seq: jax.Array, T: int, dt: int = 1) -> jax.Array:
    """Pallas equivalent of ExpandTemporalDim(T, dt)(x_seq)."""
    assert T % dt == 0, "T must be divisible by dt"
    T_eff = T // dt
    TB = x_seq.shape[0]
    assert TB % T_eff == 0, "leading dim must be divisible by T"
    B = TB // T_eff
    rest = tuple(x_seq.shape[1:])
    out_shape_final = (T_eff, B) + rest

    # Lane-dense 2-D presentation of the same contiguous buffer
    # (metadata-only reshape; no data movement here).
    inner = B * math.prod(rest)
    x2d = jnp.reshape(x_seq, (T_eff, inner))

    itemsize = jnp.dtype(x_seq.dtype).itemsize
    budget_elems = max(128, _PER_TILE_BYTES // itemsize)

    # Lane (last) tile: largest multiple of 128 dividing `inner` that fits the
    # budget; a full-extent block is always legal as a fallback.
    if inner % 128 == 0:
        tile_n = _largest_aligned_divisor(inner, 128, budget_elems) or inner
    else:
        tile_n = inner

    # Sublane (row) tile: multiple of 8 dividing T_eff that fits the remaining
    # budget; otherwise take the full T_eff extent (legal for any size).
    max_rows = max(1, budget_elems // tile_n)
    if T_eff % 8 == 0 and max_rows >= 8:
        tile_m = _largest_aligned_divisor(T_eff, 8, max_rows) or T_eff
    else:
        tile_m = T_eff

    grid = (T_eff // tile_m, inner // tile_n)
    block_spec = pl.BlockSpec((tile_m, tile_n), lambda i, j: (i, j))

    y2d = pl.pallas_call(
        _copy_kernel,
        out_shape=jax.ShapeDtypeStruct((T_eff, inner), x_seq.dtype),
        grid=grid,
        in_specs=[block_spec],
        out_specs=block_spec,
        compiler_params=pltpu.CompilerParams(
            # Every tile is an independent copy -> shard across both v7x TCs.
            dimension_semantics=("parallel", "parallel"),
        ),
    )(x2d)

    # Metadata-only reshape back to the PyTorch .view() result.
    return jnp.reshape(y2d, out_shape_final)


if __name__ == "__main__":
    # Module parameters (deterministic, synthetic): T=4, dt=1.
    T, dt = 4, 1
    B, C, H, W = 2, 4, 16, 16

    key = jax.random.PRNGKey(0)
    x_seq = jax.random.normal(key, (T * B, C, H, W), dtype=jnp.float32)

    y = expand_temporal_dim(x_seq, T, dt)
    y = jax.block_until_ready(y)

    # Reference: the pure-view semantics of the PyTorch module.
    y_ref = jnp.reshape(x_seq, (T // dt, B, C, H, W))

    assert y.shape == (T // dt, B, C, H, W), y.shape
    assert y.dtype == x_seq.dtype
    assert jnp.array_equal(y, y_ref), "mismatch vs reshape reference"

    print("KERNEL_OK")
</pallas_src>

<mosaic_0001>
module attributes {stable_mosaic.version = 11 : i64} {
  func.func @_copy_kernel(%arg0: i32, %arg1: i32, %arg2: memref<4x2048xf32, #tpu.memory_space<vmem>>, %arg3: memref<4x2048xf32, #tpu.memory_space<vmem>>) attributes {dimension_semantics = [#tpu.dimension_semantics<parallel>, #tpu.dimension_semantics<parallel>], iteration_bounds = array<i64: 1, 1>, scalar_prefetch = 0 : i64, scratch_operands = 0 : i64, tpu.core_type = #tpu.core_type<tc>, window_params = [{transform_indices = @transform_0, window_bounds = array<i64: 4, 2048>}, {transform_indices = @transform_1, window_bounds = array<i64: 4, 2048>}]} {
    %c0 = arith.constant 0 : index
    %c0_0 = arith.constant 0 : index
    %0 = vector.load %arg2[%c0, %c0_0] : memref<4x2048xf32, #tpu.memory_space<vmem>>, vector<4x2048xf32>
    %c0_1 = arith.constant 0 : index
    %c0_2 = arith.constant 0 : index
    %1 = vector.load %arg3[%c0_1, %c0_2] : memref<4x2048xf32, #tpu.memory_space<vmem>>, vector<4x2048xf32>
    tpu.vector_store %arg3[%c0_1, %c0_2], %0 {strides = array<i32>} : memref<4x2048xf32, #tpu.memory_space<vmem>>, vector<4x2048xf32>,
    return
  }
  func.func @transform_0(%arg0: i32, %arg1: i32) -> (i32, i32) {
    %c0_i32 = arith.constant 0 : i32
    return %arg0, %arg1 : i32, i32
  }
  func.func @transform_1(%arg0: i32, %arg1: i32) -> (i32, i32) {
    %c0_i32 = arith.constant 0 : i32
    return %arg0, %arg1 : i32, i32
  }
}

</mosaic_0001>

<llo_original>
// kernel: tpu_custom_call.1
$region0: #{tpu_custom_call.1}
  #allocation0 [shape = 'u32[]', space=smem, size = 0x4, offset = 0x4, fixed_abs, tag = 'smem constant byte address 0x4 - core index']
  #allocation1 [shape = 'u32[144,128]{1,0:T(1,128)}', space=vmem, size = 0x12000, scoped, tag = 'internal scratch']
  %s0 = inlined_call_operand.hbm [shape: f32[4,2048], index: 0, kind: input, shape index: {}]
  %s1 = inlined_call_operand.hbm [shape: f32[4,2048], index: 1, kind: output, shape index: {}]
  %s2 = sld [smem:[#allocation0]]
  $region18: #{tpu_custom_call.1} parent=0
    _
  %s4 = ssub.s32 1, %s2
  %s5 = scalar_select 0, %s4, %s2
  $region1: #{tpu_custom_call.1} parent=0
    #allocation2 [shape = 'u8[32768]{0}', space=vmem, size = 0x8000, scoped, tag = 'input window, operand 0, single buffered']
    #allocation3 [shape = 's32[1]{0}', space=sflag, size = 0x4, scoped, tag = 'scoped memory for tpu_custom_call.1']
    #allocation4 [shape = 's32[1]{0}', space=sflag, size = 0x4, scoped, tag = 'scoped memory for tpu_custom_call.1']
    #allocation5 [shape = 'u8[32768]{0}', space=vmem, size = 0x8000, scoped, tag = 'output window, operand 0, single buffered']
    %6 = vsyncpa [#allocation3], 0
    %7 = vsyncpa [#allocation4], 0
    // Predicated region
    $region2: #{tpu_custom_call.1} parent=1 // pred_check
      _
    $region3: #{tpu_custom_call.1} parent=1 // pred_check_branch
      %9 = sbr.rel (0) target = $region5
    $region4: #{tpu_custom_call.1} parent=1 // pred_region
      %s11 = ssub.s32 1024, 1024
      %12 = vsyncadd [#allocation3], %s11
      %s14 = sshll.u32 [#allocation2], 4
      %s15 = int_to_ptr.vmem [resolvable:$true] %s14
      %17 = dma.hbm_to_vmem [thread:$0]  %s0, 1024, %s15, [#allocation3]
    $region5: #{tpu_custom_call.1} parent=1 // pred_fallthru
      _
    // Predicated region
    $region6: #{tpu_custom_call.1} parent=1 // pred_check
      _
    $region7: #{tpu_custom_call.1} parent=1 // pred_check_branch
      %19 = sbr.rel (0) target = $region9
    $region8: #{tpu_custom_call.1} parent=1 // pred_region
      %20 = dma.done [#allocation3], 1024
    $region9: #{tpu_custom_call.1} parent=1 // pred_fallthru
      _
    %v21 = vld [vmem:[#allocation2] sm:$0xff]
    %v22 = vld [vmem:[#allocation2 + $0x8] sm:$0xff]
    %v23 = vld [vmem:[#allocation2 + $0x10] sm:$0xff]
    %v24 = vld [vmem:[#allocation2 + $0x18] sm:$0xff]
    %v25 = vld [vmem:[#allocation2 + $0x20] sm:$0xff]
    %v26 = vld [vmem:[#allocation2 + $0x28] sm:$0xff]
    %v27 = vld [vmem:[#allocation2 + $0x30] sm:$0xff]
    %v28 = vld [vmem:[#allocation2 + $0x38] sm:$0xff]
    %29 = vst [vmem:[#allocation5] sm:$0xff] %v21
    %30 = vst [vmem:[#allocation5 + $0x8] sm:$0xff] %v22
    %31 = vst [vmem:[#allocation5 + $0x10] sm:$0xff] %v23
    %32 = vst [vmem:[#allocation5 + $0x18] sm:$0xff] %v24
    %33 = vst [vmem:[#allocation5 + $0x20] sm:$0xff] %v25
    %34 = vst [vmem:[#allocation5 + $0x28] sm:$0xff] %v26
    %35 = vst [vmem:[#allocation5 + $0x30] sm:$0xff] %v27
    %36 = vst [vmem:[#allocation5 + $0x38] sm:$0xff] %v28
    // Predicated region
    $region10: #{tpu_custom_call.1} parent=1 // pred_check
      _
    $region11: #{tpu_custom_call.1} parent=1 // pred_check_branch
      %38 = sbr.rel (0) target = $region13
    $region12: #{tpu_custom_call.1} parent=1 // pred_region
      %s40 = ssub.s32 1024, 1024
      %41 = vsyncadd [#allocation4], %s40
      %s43 = sshll.u32 [#allocation5], 4
      %s44 = int_to_ptr.vmem [resolvable:$true] %s43
      %46 = dma.vmem_to_hbm [thread:$0]  %s44, 1024, %s1, [#allocation4]
    $region13: #{tpu_custom_call.1} parent=1 // pred_fallthru
      _
    // Predicated region
    $region14: #{tpu_custom_call.1} parent=1 // pred_check
      _
    $region15: #{tpu_custom_call.1} parent=1 // pred_check_branch
      %48 = sbr.rel (0) target = $region17
    $region16: #{tpu_custom_call.1} parent=1 // pred_region
      %49 = dma.done [#allocation4], 1024
    $region17: #{tpu_custom_call.1} parent=1 // pred_fallthru
      _
    %50 = vsyncpa [#allocation3], 1
    %51 = vsyncpa [#allocation4], 1

</llo_original>
